<compile_context>
chip_gen: v7x
topology: tpu7x:2x2x1
jax: 0.10.0
libtpu: 0.0.40
codegen_flags: <defaults>
</compile_context>

<pallas_src>
import jax
import jax.numpy as jnp
from jax.experimental import pallas as pl
from jax.experimental.pallas import tpu as pltpu

# ---- module hyper-parameters -------------------------------------------------
B = 2              # batch
C = 32             # in_shape (feature dim, LayerNorm axis)
T = 16             # sequence length
HD = 8             # head_dim
NH = 2             # num_heads
E = HD * NH        # embed_dim = 16
LN_EPS = 1e-6

# ---- packed parameter slab layout (row offsets are multiples of 8) ------------
ROW_WQKV = 0            # rows [0, 32):  fused QKV weight (C, 3E), gamma & 1/sqrt(d) folded
ROW_BQKV = 32           # row 32:        fused QKV bias (3E,)
ROW_WO = 40             # rows [40, 72): fc_o weight (torch layout (C, E)) in cols [0, E)
COL_BO = E              # rows [40, 72): fc_o bias stored as a column in col E
ROW_EYE = 72            # rows [72, 88): (T, T) identity used for the MXU transpose
SLAB_R, SLAB_C = 88, 3 * E


# ------------------------------ Pallas kernel ---------------------------------
def attention_block_kernel(x_ref, slab_ref, out_ref):
    f32, bf16 = jnp.float32, jnp.bfloat16

    # ---- parameters: one slab, static (zero-cost) slices ----
    wqkv = slab_ref[ROW_WQKV:ROW_WQKV + C, :].astype(bf16)        # (C, 3E)
    bqkv = slab_ref[ROW_BQKV:ROW_BQKV + 1, :]                     # (1, 3E)  f32
    wo = slab_ref[ROW_WO:ROW_WO + C, 0:E].astype(bf16)            # (C, E)   torch layout
    bo = slab_ref[ROW_WO:ROW_WO + C, COL_BO:COL_BO + 1]           # (C, 1)   f32
    eye_t = slab_ref[ROW_EYE:ROW_EYE + T, 0:T].astype(bf16)       # (T, T)

    # Static unroll over the two batch elements: 4 independent
    # matmul -> softmax -> matmul chains for the scheduler to interleave.
    for b in range(B):
        x_ct = x_ref[b]                                            # (C, T) native layout

        # ---- LayerNorm over the feature (sublane) axis; gamma/beta folded ----
        mu = jnp.mean(x_ct, axis=0, keepdims=True)                 # (1, T)
        xc = x_ct - mu
        var = jnp.mean(xc * xc, axis=0, keepdims=True)
        ln_ct = (xc * jax.lax.rsqrt(var + LN_EPS)).astype(bf16)    # (C, T)

        # ---- token-major view via one tiny MXU identity matmul ----
        # ln_tc[t, c] = ln_ct[c, t]
        ln_tc = jax.lax.dot_general(
            eye_t, ln_ct, (((1,), (1,)), ((), ())),
            preferred_element_type=f32).astype(bf16)               # (T, C)

        # ---- fused QKV projection (gamma/beta and 1/sqrt(d) pre-folded) ----
        qkv = jnp.dot(ln_tc, wqkv, preferred_element_type=f32) + bqkv   # (T, 3E) f32

        mha_ct = None
        for h in range(NH):                                        # static unroll (2 heads)
            q = qkv[:, h * HD:(h + 1) * HD].astype(bf16)           # (T, HD), pre-scaled
            k = qkv[:, E + h * HD:E + (h + 1) * HD].astype(bf16)   # (T, HD)
            v = qkv[:, 2 * E + h * HD:2 * E + (h + 1) * HD].astype(bf16)

            # V @ Wo_h first: independent of the softmax -> overlaps its latency.
            # vo[c, j] = sum_d wo[c, h*HD + d] * v[j, d]
            vo = jax.lax.dot_general(
                wo[:, h * HD:(h + 1) * HD], v, (((1,), (1,)), ((), ())),
                preferred_element_type=f32).astype(bf16)           # (C, T)

            # scores (the 1/sqrt(HD) scale is folded into the Q projection)
            s = jax.lax.dot_general(q, k, (((1,), (1,)), ((), ())),
                                    preferred_element_type=f32)    # (T, T)
            s = s - jnp.max(s, axis=-1, keepdims=True)
            p = jnp.exp(s)
            p = p * pl.reciprocal(jnp.sum(p, axis=-1, keepdims=True), approx=True)

            # mha_ct[c, i] += sum_j vo[c, j] * p[i, j]  (head output already
            # projected through fc_o, so heads simply accumulate)
            part = jax.lax.dot_general(vo, p.astype(bf16), (((1,), (1,)), ((), ())),
                                       preferred_element_type=f32)  # (C, T)
            mha_ct = part if mha_ct is None else mha_ct + part

        # Residual on the pre-LN input + fc_o bias, stored in native (C, T) layout.
        # TODO(synk): Dropout(0.3) / MHA Dropout(0.5) are identity in eval mode;
        # training-mode dropout is intentionally not modeled.
        out_ref[b, :, :] = x_ct + mha_ct + bo


# -------------------------------- wrapper --------------------------------------
@jax.jit
def attention_block_forward(x, slab):
    """x: (B, C, T) float32 exactly as in PyTorch; slab: packed params. -> (B, C, T)."""
    return pl.pallas_call(
        attention_block_kernel,
        out_shape=jax.ShapeDtypeStruct((B, C, T), jnp.float32),
        in_specs=[pl.BlockSpec(memory_space=pltpu.MemorySpace.VMEM),
                  pl.BlockSpec(memory_space=pltpu.MemorySpace.VMEM)],
        out_specs=pl.BlockSpec(memory_space=pltpu.MemorySpace.VMEM),
    )(x, slab)


# ---------------------------- parameter handling -------------------------------
def init_params(key):
    """Deterministic torch-style parameters of the _AttentionBlock."""
    ks = jax.random.split(key, 8)
    s = 0.1
    wq = s * jax.random.normal(ks[0], (E, C), jnp.float32)    # nn.Linear(C, E).weight
    bq = s * jax.random.normal(ks[1], (E,), jnp.float32)
    wk = s * jax.random.normal(ks[2], (E, C), jnp.float32)
    bk = s * jax.random.normal(ks[3], (E,), jnp.float32)
    wv = s * jax.random.normal(ks[4], (E, C), jnp.float32)
    bv = s * jax.random.normal(ks[5], (E,), jnp.float32)
    wo = s * jax.random.normal(ks[6], (C, E), jnp.float32)    # nn.Linear(E, C).weight
    bo = s * jax.random.normal(ks[7], (C,), jnp.float32)
    idx = jnp.arange(C, dtype=jnp.float32)
    ln_g = 1.0 + 0.1 * jnp.cos(idx)
    ln_b = 0.05 * jnp.sin(idx)
    return (ln_g, ln_b, wq, bq, wk, bk, wv, bv, wo, bo)


def pack_params(params):
    """Fold LN gamma/beta and 1/sqrt(head_dim) into the projections and pack
    everything (plus the transpose identity) into one sublane-aligned f32 slab."""
    ln_g, ln_b, wq, bq, wk, bk, wv, bv, wo, bo = params
    scale = 1.0 / (HD ** 0.5)

    def fold(w, b):                       # w: (E, C) torch layout, b: (E,)
        return ln_g[:, None] * w.T, ln_b @ w.T + b       # (C, E), (E,)

    wq_f, bq_f = fold(wq, bq)
    wk_f, bk_f = fold(wk, bk)
    wv_f, bv_f = fold(wv, bv)
    wqkv = jnp.concatenate([wq_f * scale, wk_f, wv_f], axis=1)       # (C, 3E)
    bqkv = jnp.concatenate([bq_f * scale, bk_f, bv_f])               # (3E,)

    slab = jnp.zeros((SLAB_R, SLAB_C), jnp.float32)
    slab = slab.at[ROW_WQKV:ROW_WQKV + C, :].set(wqkv)
    slab = slab.at[ROW_BQKV, :].set(bqkv)
    slab = slab.at[ROW_WO:ROW_WO + C, 0:E].set(wo)                   # torch (C, E)
    slab = slab.at[ROW_WO:ROW_WO + C, COL_BO].set(bo)
    slab = slab.at[ROW_EYE:ROW_EYE + T, 0:T].set(jnp.eye(T, dtype=jnp.float32))
    return slab


# ------------------- pure-JAX reference (eval-mode PyTorch) --------------------
def reference_forward(x, params):
    ln_g, ln_b, wq, bq, wk, bk, wv, bv, wo, bo = params
    X = jnp.transpose(x, (0, 2, 1))                                   # (B, T, C)

    mu = jnp.mean(X, axis=-1, keepdims=True)
    var = jnp.mean((X - mu) ** 2, axis=-1, keepdims=True)
    ln = (X - mu) / jnp.sqrt(var + LN_EPS) * ln_g + ln_b

    Q = ln @ wq.T + bq
    K = ln @ wk.T + bk
    V = ln @ wv.T + bv
    Qh = jnp.concatenate(jnp.split(Q, NH, axis=-1), axis=0)           # (NH*B, T, HD)
    Kh = jnp.concatenate(jnp.split(K, NH, axis=-1), axis=0)
    Vh = jnp.concatenate(jnp.split(V, NH, axis=-1), axis=0)

    S = jnp.einsum('btd,bsd->bts', Qh, Kh) / (HD ** 0.5)
    W = jax.nn.softmax(S, axis=-1)
    Hh = jnp.einsum('bts,bsd->btd', W, Vh)
    Hcat = jnp.concatenate(jnp.split(Hh, NH, axis=0), axis=-1)        # (B, T, E)

    out = Hcat @ wo.T + bo
    out = X + out                                                      # dropouts = identity
    return jnp.transpose(out, (0, 2, 1))                               # (B, C, T)


if __name__ == "__main__":
    key = jax.random.PRNGKey(0)
    kx, kp = jax.random.split(key)
    x = jax.random.normal(kx, (B, C, T), jnp.float32)                  # (batch, in_shape, T)
    params = init_params(kp)
    slab = pack_params(params)

    out = attention_block_forward(x, slab)
    jax.block_until_ready(out)
    assert out.shape == (B, C, T), out.shape

    ref = reference_forward(x, params)
    max_err = float(jnp.max(jnp.abs(out - ref)))
    assert jnp.allclose(out, ref, atol=2e-2, rtol=2e-2), f"max_err={max_err}"
    print("KERNEL_OK")
</pallas_src>

<mosaic_0001>
module attributes {stable_mosaic.version = 11 : i64} {
  func.func @attention_block_kernel(%arg0: memref<2x32x16xf32, #tpu.memory_space<vmem>>, %arg1: memref<88x48xf32, #tpu.memory_space<vmem>>, %arg2: memref<2x32x16xf32, #tpu.memory_space<vmem>>) attributes {dimension_semantics = [], scalar_prefetch = 0 : i64, scratch_operands = 0 : i64, tpu.core_type = #tpu.core_type<tc>} {
    %c0 = arith.constant 0 : index
    %c0_0 = arith.constant 0 : index
    %0 = vector.load %arg1[%c0, %c0_0] : memref<88x48xf32, #tpu.memory_space<vmem>>, vector<32x48xf32>
    %1 = arith.truncf %0 : vector<32x48xf32> to vector<32x48xbf16>
    %c32 = arith.constant 32 : index
    %c0_1 = arith.constant 0 : index
    %2 = vector.load %arg1[%c32, %c0_1] : memref<88x48xf32, #tpu.memory_space<vmem>>, vector<1x48xf32>
    %c40 = arith.constant 40 : index
    %c0_2 = arith.constant 0 : index
    %3 = vector.load %arg1[%c40, %c0_2] : memref<88x48xf32, #tpu.memory_space<vmem>>, vector<32x16xf32>
    %4 = arith.truncf %3 : vector<32x16xf32> to vector<32x16xbf16>
    %c40_3 = arith.constant 40 : index
    %c16 = arith.constant 16 : index
    %5 = vector.load %arg1[%c40_3, %c16] : memref<88x48xf32, #tpu.memory_space<vmem>>, vector<32x1xf32>
    %c72 = arith.constant 72 : index
    %c0_4 = arith.constant 0 : index
    %6 = vector.load %arg1[%c72, %c0_4] : memref<88x48xf32, #tpu.memory_space<vmem>>, vector<16x16xf32>
    %7 = arith.truncf %6 : vector<16x16xf32> to vector<16x16xbf16>
    %c0_5 = arith.constant 0 : index
    %c0_6 = arith.constant 0 : index
    %c0_7 = arith.constant 0 : index
    %8 = vector.load %arg0[%c0_5, %c0_6, %c0_7] : memref<2x32x16xf32, #tpu.memory_space<vmem>>, vector<1x32x16xf32>
    %9 = vector.shape_cast %8 : vector<1x32x16xf32> to vector<32x16xf32>
    %cst = arith.constant dense<0.000000e+00> : vector<16xf32>
    %10 = vector.multi_reduction <add>, %9, %cst [0] : vector<32x16xf32> to vector<16xf32>
    %11 = vector.shape_cast %10 : vector<16xf32> to vector<1x16xf32>
    %cst_8 = arith.constant 3.200000e+01 : f32
    %12 = vector.broadcast %cst_8 : f32 to vector<1x16xf32>
    %13 = arith.divf %11, %12 : vector<1x16xf32>
    %14 = vector.broadcast %13 : vector<1x16xf32> to vector<32x16xf32>
    %15 = arith.subf %9, %14 : vector<32x16xf32>
    %16 = arith.mulf %15, %15 : vector<32x16xf32>
    %cst_9 = arith.constant dense<0.000000e+00> : vector<16xf32>
    %17 = vector.multi_reduction <add>, %16, %cst_9 [0] : vector<32x16xf32> to vector<16xf32>
    %18 = vector.shape_cast %17 : vector<16xf32> to vector<1x16xf32>
    %cst_10 = arith.constant 3.200000e+01 : f32
    %19 = vector.broadcast %cst_10 : f32 to vector<1x16xf32>
    %20 = arith.divf %18, %19 : vector<1x16xf32>
    %cst_11 = arith.constant 9.99999997E-7 : f32
    %21 = vector.broadcast %cst_11 : f32 to vector<1x16xf32>
    %22 = arith.addf %20, %21 : vector<1x16xf32>
    %23 = math.rsqrt %22 : vector<1x16xf32>
    %24 = vector.broadcast %23 : vector<1x16xf32> to vector<32x16xf32>
    %25 = arith.mulf %15, %24 : vector<32x16xf32>
    %26 = arith.truncf %25 : vector<32x16xf32> to vector<32x16xbf16>
    %cst_12 = arith.constant dense<0.000000e+00> : vector<16x32xf32>
    %27 = tpu.matmul %7, %26, %cst_12 {dimension_numbers = #tpu.dot_dimension_numbers<[1], [1], [0], [0], [0, 0, 1, 0], [], []>} : vector<16x16xbf16>, vector<32x16xbf16>, vector<16x32xf32> -> vector<16x32xf32>
    %28 = arith.truncf %27 : vector<16x32xf32> to vector<16x32xbf16>
    %cst_13 = arith.constant dense<0.000000e+00> : vector<16x48xf32>
    %29 = tpu.matmul %28, %1, %cst_13 {dimension_numbers = #tpu.dot_dimension_numbers<[1], [0], [0], [1], [0, 0, 1, 1], [], []>} : vector<16x32xbf16>, vector<32x48xbf16>, vector<16x48xf32> -> vector<16x48xf32>
    %30 = vector.broadcast %2 : vector<1x48xf32> to vector<16x48xf32>
    %31 = arith.addf %29, %30 : vector<16x48xf32>
    %32 = vector.extract_strided_slice %31 {offsets = [0, 0], sizes = [16, 8], strides = [1, 1]} : vector<16x48xf32> to vector<16x8xf32>
    %33 = arith.truncf %32 : vector<16x8xf32> to vector<16x8xbf16>
    %34 = vector.extract_strided_slice %31 {offsets = [0, 16], sizes = [16, 8], strides = [1, 1]} : vector<16x48xf32> to vector<16x8xf32>
    %35 = arith.truncf %34 : vector<16x8xf32> to vector<16x8xbf16>
    %36 = vector.extract_strided_slice %31 {offsets = [0, 32], sizes = [16, 8], strides = [1, 1]} : vector<16x48xf32> to vector<16x8xf32>
    %37 = arith.truncf %36 : vector<16x8xf32> to vector<16x8xbf16>
    %38 = vector.extract_strided_slice %4 {offsets = [0, 0], sizes = [32, 8], strides = [1, 1]} : vector<32x16xbf16> to vector<32x8xbf16>
    %cst_14 = arith.constant dense<0.000000e+00> : vector<32x16xf32>
    %39 = tpu.matmul %38, %37, %cst_14 {dimension_numbers = #tpu.dot_dimension_numbers<[1], [1], [0], [0], [0, 0, 1, 0], [], []>} : vector<32x8xbf16>, vector<16x8xbf16>, vector<32x16xf32> -> vector<32x16xf32>
    %40 = arith.truncf %39 : vector<32x16xf32> to vector<32x16xbf16>
    %cst_15 = arith.constant dense<0.000000e+00> : vector<16x16xf32>
    %41 = tpu.matmul %33, %35, %cst_15 {dimension_numbers = #tpu.dot_dimension_numbers<[1], [1], [0], [0], [0, 0, 1, 0], [], []>} : vector<16x8xbf16>, vector<16x8xbf16>, vector<16x16xf32> -> vector<16x16xf32>
    %cst_16 = arith.constant dense<0xFF800000> : vector<16xf32>
    %42 = vector.multi_reduction <maximumf>, %41, %cst_16 [1] : vector<16x16xf32> to vector<16xf32>
    %43 = vector.shape_cast %42 : vector<16xf32> to vector<16x1xf32>
    %44 = vector.broadcast %43 : vector<16x1xf32> to vector<16x16xf32>
    %45 = arith.subf %41, %44 : vector<16x16xf32>
    %46 = math.exp %45 : vector<16x16xf32>
    %cst_17 = arith.constant dense<0.000000e+00> : vector<16xf32>
    %47 = vector.multi_reduction <add>, %46, %cst_17 [1] : vector<16x16xf32> to vector<16xf32>
    %48 = vector.shape_cast %47 : vector<16xf32> to vector<16x1xf32>
    %49 = tpu.reciprocal %48 {approx = true} : vector<16x1xf32> -> vector<16x1xf32>
    %50 = vector.broadcast %49 : vector<16x1xf32> to vector<16x16xf32>
    %51 = arith.mulf %46, %50 : vector<16x16xf32>
    %52 = arith.truncf %51 : vector<16x16xf32> to vector<16x16xbf16>
    %cst_18 = arith.constant dense<0.000000e+00> : vector<32x16xf32>
    %53 = tpu.matmul %40, %52, %cst_18 {dimension_numbers = #tpu.dot_dimension_numbers<[1], [1], [0], [0], [0, 0, 1, 0], [], []>} : vector<32x16xbf16>, vector<16x16xbf16>, vector<32x16xf32> -> vector<32x16xf32>
    %54 = vector.extract_strided_slice %31 {offsets = [0, 8], sizes = [16, 8], strides = [1, 1]} : vector<16x48xf32> to vector<16x8xf32>
    %55 = arith.truncf %54 : vector<16x8xf32> to vector<16x8xbf16>
    %56 = vector.extract_strided_slice %31 {offsets = [0, 24], sizes = [16, 8], strides = [1, 1]} : vector<16x48xf32> to vector<16x8xf32>
    %57 = arith.truncf %56 : vector<16x8xf32> to vector<16x8xbf16>
    %58 = vector.extract_strided_slice %31 {offsets = [0, 40], sizes = [16, 8], strides = [1, 1]} : vector<16x48xf32> to vector<16x8xf32>
    %59 = arith.truncf %58 : vector<16x8xf32> to vector<16x8xbf16>
    %60 = vector.extract_strided_slice %4 {offsets = [0, 8], sizes = [32, 8], strides = [1, 1]} : vector<32x16xbf16> to vector<32x8xbf16>
    %cst_19 = arith.constant dense<0.000000e+00> : vector<32x16xf32>
    %61 = tpu.matmul %60, %59, %cst_19 {dimension_numbers = #tpu.dot_dimension_numbers<[1], [1], [0], [0], [0, 0, 1, 0], [], []>} : vector<32x8xbf16>, vector<16x8xbf16>, vector<32x16xf32> -> vector<32x16xf32>
    %62 = arith.truncf %61 : vector<32x16xf32> to vector<32x16xbf16>
    %cst_20 = arith.constant dense<0.000000e+00> : vector<16x16xf32>
    %63 = tpu.matmul %55, %57, %cst_20 {dimension_numbers = #tpu.dot_dimension_numbers<[1], [1], [0], [0], [0, 0, 1, 0], [], []>} : vector<16x8xbf16>, vector<16x8xbf16>, vector<16x16xf32> -> vector<16x16xf32>
    %cst_21 = arith.constant dense<0xFF800000> : vector<16xf32>
    %64 = vector.multi_reduction <maximumf>, %63, %cst_21 [1] : vector<16x16xf32> to vector<16xf32>
    %65 = vector.shape_cast %64 : vector<16xf32> to vector<16x1xf32>
    %66 = vector.broadcast %65 : vector<16x1xf32> to vector<16x16xf32>
    %67 = arith.subf %63, %66 : vector<16x16xf32>
    %68 = math.exp %67 : vector<16x16xf32>
    %cst_22 = arith.constant dense<0.000000e+00> : vector<16xf32>
    %69 = vector.multi_reduction <add>, %68, %cst_22 [1] : vector<16x16xf32> to vector<16xf32>
    %70 = vector.shape_cast %69 : vector<16xf32> to vector<16x1xf32>
    %71 = tpu.reciprocal %70 {approx = true} : vector<16x1xf32> -> vector<16x1xf32>
    %72 = vector.broadcast %71 : vector<16x1xf32> to vector<16x16xf32>
    %73 = arith.mulf %68, %72 : vector<16x16xf32>
    %74 = arith.truncf %73 : vector<16x16xf32> to vector<16x16xbf16>
    %cst_23 = arith.constant dense<0.000000e+00> : vector<32x16xf32>
    %75 = tpu.matmul %62, %74, %cst_23 {dimension_numbers = #tpu.dot_dimension_numbers<[1], [1], [0], [0], [0, 0, 1, 0], [], []>} : vector<32x16xbf16>, vector<16x16xbf16>, vector<32x16xf32> -> vector<32x16xf32>
    %76 = arith.addf %53, %75 : vector<32x16xf32>
    %77 = arith.addf %9, %76 : vector<32x16xf32>
    %78 = vector.broadcast %5 : vector<32x1xf32> to vector<32x16xf32>
    %79 = arith.addf %77, %78 : vector<32x16xf32>
    %c0_24 = arith.constant 0 : index
    %c0_25 = arith.constant 0 : index
    %c0_26 = arith.constant 0 : index
    %80 = vector.load %arg2[%c0_24, %c0_25, %c0_26] : memref<2x32x16xf32, #tpu.memory_space<vmem>>, vector<1x32x16xf32>
    %81 = vector.shape_cast %80 : vector<1x32x16xf32> to vector<32x16xf32>
    %82 = vector.shape_cast %79 : vector<32x16xf32> to vector<1x32x16xf32>
    tpu.vector_store %arg2[%c0_24, %c0_25, %c0_26], %82 {strides = array<i32>} : memref<2x32x16xf32, #tpu.memory_space<vmem>>, vector<1x32x16xf32>,
    %c1 = arith.constant 1 : index
    %c0_27 = arith.constant 0 : index
    %c0_28 = arith.constant 0 : index
    %83 = vector.load %arg0[%c1, %c0_27, %c0_28] : memref<2x32x16xf32, #tpu.memory_space<vmem>>, vector<1x32x16xf32>
    %84 = vector.shape_cast %83 : vector<1x32x16xf32> to vector<32x16xf32>
    %cst_29 = arith.constant dense<0.000000e+00> : vector<16xf32>
    %85 = vector.multi_reduction <add>, %84, %cst_29 [0] : vector<32x16xf32> to vector<16xf32>
    %86 = vector.shape_cast %85 : vector<16xf32> to vector<1x16xf32>
    %cst_30 = arith.constant 3.200000e+01 : f32
    %87 = vector.broadcast %cst_30 : f32 to vector<1x16xf32>
    %88 = arith.divf %86, %87 : vector<1x16xf32>
    %89 = vector.broadcast %88 : vector<1x16xf32> to vector<32x16xf32>
    %90 = arith.subf %84, %89 : vector<32x16xf32>
    %91 = arith.mulf %90, %90 : vector<32x16xf32>
    %cst_31 = arith.constant dense<0.000000e+00> : vector<16xf32>
    %92 = vector.multi_reduction <add>, %91, %cst_31 [0] : vector<32x16xf32> to vector<16xf32>
    %93 = vector.shape_cast %92 : vector<16xf32> to vector<1x16xf32>
    %cst_32 = arith.constant 3.200000e+01 : f32
    %94 = vector.broadcast %cst_32 : f32 to vector<1x16xf32>
    %95 = arith.divf %93, %94 : vector<1x16xf32>
    %cst_33 = arith.constant 9.99999997E-7 : f32
    %96 = vector.broadcast %cst_33 : f32 to vector<1x16xf32>
    %97 = arith.addf %95, %96 : vector<1x16xf32>
    %98 = math.rsqrt %97 : vector<1x16xf32>
    %99 = vector.broadcast %98 : vector<1x16xf32> to vector<32x16xf32>
    %100 = arith.mulf %90, %99 : vector<32x16xf32>
    %101 = arith.truncf %100 : vector<32x16xf32> to vector<32x16xbf16>
    %cst_34 = arith.constant dense<0.000000e+00> : vector<16x32xf32>
    %102 = tpu.matmul %7, %101, %cst_34 {dimension_numbers = #tpu.dot_dimension_numbers<[1], [1], [0], [0], [0, 0, 1, 0], [], []>} : vector<16x16xbf16>, vector<32x16xbf16>, vector<16x32xf32> -> vector<16x32xf32>
    %103 = arith.truncf %102 : vector<16x32xf32> to vector<16x32xbf16>
    %cst_35 = arith.constant dense<0.000000e+00> : vector<16x48xf32>
    %104 = tpu.matmul %103, %1, %cst_35 {dimension_numbers = #tpu.dot_dimension_numbers<[1], [0], [0], [1], [0, 0, 1, 1], [], []>} : vector<16x32xbf16>, vector<32x48xbf16>, vector<16x48xf32> -> vector<16x48xf32>
    %105 = vector.broadcast %2 : vector<1x48xf32> to vector<16x48xf32>
    %106 = arith.addf %104, %105 : vector<16x48xf32>
    %107 = vector.extract_strided_slice %106 {offsets = [0, 0], sizes = [16, 8], strides = [1, 1]} : vector<16x48xf32> to vector<16x8xf32>
    %108 = arith.truncf %107 : vector<16x8xf32> to vector<16x8xbf16>
    %109 = vector.extract_strided_slice %106 {offsets = [0, 16], sizes = [16, 8], strides = [1, 1]} : vector<16x48xf32> to vector<16x8xf32>
    %110 = arith.truncf %109 : vector<16x8xf32> to vector<16x8xbf16>
    %111 = vector.extract_strided_slice %106 {offsets = [0, 32], sizes = [16, 8], strides = [1, 1]} : vector<16x48xf32> to vector<16x8xf32>
    %112 = arith.truncf %111 : vector<16x8xf32> to vector<16x8xbf16>
    %113 = vector.extract_strided_slice %4 {offsets = [0, 0], sizes = [32, 8], strides = [1, 1]} : vector<32x16xbf16> to vector<32x8xbf16>
    %cst_36 = arith.constant dense<0.000000e+00> : vector<32x16xf32>
    %114 = tpu.matmul %113, %112, %cst_36 {dimension_numbers = #tpu.dot_dimension_numbers<[1], [1], [0], [0], [0, 0, 1, 0], [], []>} : vector<32x8xbf16>, vector<16x8xbf16>, vector<32x16xf32> -> vector<32x16xf32>
    %115 = arith.truncf %114 : vector<32x16xf32> to vector<32x16xbf16>
    %cst_37 = arith.constant dense<0.000000e+00> : vector<16x16xf32>
    %116 = tpu.matmul %108, %110, %cst_37 {dimension_numbers = #tpu.dot_dimension_numbers<[1], [1], [0], [0], [0, 0, 1, 0], [], []>} : vector<16x8xbf16>, vector<16x8xbf16>, vector<16x16xf32> -> vector<16x16xf32>
    %cst_38 = arith.constant dense<0xFF800000> : vector<16xf32>
    %117 = vector.multi_reduction <maximumf>, %116, %cst_38 [1] : vector<16x16xf32> to vector<16xf32>
    %118 = vector.shape_cast %117 : vector<16xf32> to vector<16x1xf32>
    %119 = vector.broadcast %118 : vector<16x1xf32> to vector<16x16xf32>
    %120 = arith.subf %116, %119 : vector<16x16xf32>
    %121 = math.exp %120 : vector<16x16xf32>
    %cst_39 = arith.constant dense<0.000000e+00> : vector<16xf32>
    %122 = vector.multi_reduction <add>, %121, %cst_39 [1] : vector<16x16xf32> to vector<16xf32>
    %123 = vector.shape_cast %122 : vector<16xf32> to vector<16x1xf32>
    %124 = tpu.reciprocal %123 {approx = true} : vector<16x1xf32> -> vector<16x1xf32>
    %125 = vector.broadcast %124 : vector<16x1xf32> to vector<16x16xf32>
    %126 = arith.mulf %121, %125 : vector<16x16xf32>
    %127 = arith.truncf %126 : vector<16x16xf32> to vector<16x16xbf16>
    %cst_40 = arith.constant dense<0.000000e+00> : vector<32x16xf32>
    %128 = tpu.matmul %115, %127, %cst_40 {dimension_numbers = #tpu.dot_dimension_numbers<[1], [1], [0], [0], [0, 0, 1, 0], [], []>} : vector<32x16xbf16>, vector<16x16xbf16>, vector<32x16xf32> -> vector<32x16xf32>
    %129 = vector.extract_strided_slice %106 {offsets = [0, 8], sizes = [16, 8], strides = [1, 1]} : vector<16x48xf32> to vector<16x8xf32>
    %130 = arith.truncf %129 : vector<16x8xf32> to vector<16x8xbf16>
    %131 = vector.extract_strided_slice %106 {offsets = [0, 24], sizes = [16, 8], strides = [1, 1]} : vector<16x48xf32> to vector<16x8xf32>
    %132 = arith.truncf %131 : vector<16x8xf32> to vector<16x8xbf16>
    %133 = vector.extract_strided_slice %106 {offsets = [0, 40], sizes = [16, 8], strides = [1, 1]} : vector<16x48xf32> to vector<16x8xf32>
    %134 = arith.truncf %133 : vector<16x8xf32> to vector<16x8xbf16>
    %135 = vector.extract_strided_slice %4 {offsets = [0, 8], sizes = [32, 8], strides = [1, 1]} : vector<32x16xbf16> to vector<32x8xbf16>
    %cst_41 = arith.constant dense<0.000000e+00> : vector<32x16xf32>
    %136 = tpu.matmul %135, %134, %cst_41 {dimension_numbers = #tpu.dot_dimension_numbers<[1], [1], [0], [0], [0, 0, 1, 0], [], []>} : vector<32x8xbf16>, vector<16x8xbf16>, vector<32x16xf32> -> vector<32x16xf32>
    %137 = arith.truncf %136 : vector<32x16xf32> to vector<32x16xbf16>
    %cst_42 = arith.constant dense<0.000000e+00> : vector<16x16xf32>
    %138 = tpu.matmul %130, %132, %cst_42 {dimension_numbers = #tpu.dot_dimension_numbers<[1], [1], [0], [0], [0, 0, 1, 0], [], []>} : vector<16x8xbf16>, vector<16x8xbf16>, vector<16x16xf32> -> vector<16x16xf32>
    %cst_43 = arith.constant dense<0xFF800000> : vector<16xf32>
    %139 = vector.multi_reduction <maximumf>, %138, %cst_43 [1] : vector<16x16xf32> to vector<16xf32>
    %140 = vector.shape_cast %139 : vector<16xf32> to vector<16x1xf32>
    %141 = vector.broadcast %140 : vector<16x1xf32> to vector<16x16xf32>
    %142 = arith.subf %138, %141 : vector<16x16xf32>
    %143 = math.exp %142 : vector<16x16xf32>
    %cst_44 = arith.constant dense<0.000000e+00> : vector<16xf32>
    %144 = vector.multi_reduction <add>, %143, %cst_44 [1] : vector<16x16xf32> to vector<16xf32>
    %145 = vector.shape_cast %144 : vector<16xf32> to vector<16x1xf32>
    %146 = tpu.reciprocal %145 {approx = true} : vector<16x1xf32> -> vector<16x1xf32>
    %147 = vector.broadcast %146 : vector<16x1xf32> to vector<16x16xf32>
    %148 = arith.mulf %143, %147 : vector<16x16xf32>
    %149 = arith.truncf %148 : vector<16x16xf32> to vector<16x16xbf16>
    %cst_45 = arith.constant dense<0.000000e+00> : vector<32x16xf32>
    %150 = tpu.matmul %137, %149, %cst_45 {dimension_numbers = #tpu.dot_dimension_numbers<[1], [1], [0], [0], [0, 0, 1, 0], [], []>} : vector<32x16xbf16>, vector<16x16xbf16>, vector<32x16xf32> -> vector<32x16xf32>
    %151 = arith.addf %128, %150 : vector<32x16xf32>
    %152 = arith.addf %84, %151 : vector<32x16xf32>
    %153 = vector.broadcast %5 : vector<32x1xf32> to vector<32x16xf32>
    %154 = arith.addf %152, %153 : vector<32x16xf32>
    %c1_46 = arith.constant 1 : index
    %c0_47 = arith.constant 0 : index
    %c0_48 = arith.constant 0 : index
    %155 = vector.load %arg2[%c1_46, %c0_47, %c0_48] : memref<2x32x16xf32, #tpu.memory_space<vmem>>, vector<1x32x16xf32>
    %156 = vector.shape_cast %155 : vector<1x32x16xf32> to vector<32x16xf32>
    %157 = vector.shape_cast %154 : vector<32x16xf32> to vector<1x32x16xf32>
    tpu.vector_store %arg2[%c1_46, %c0_47, %c0_48], %157 {strides = array<i32>} : memref<2x32x16xf32, #tpu.memory_space<vmem>>, vector<1x32x16xf32>,
    return
  }
}

</mosaic_0001>

<llo_original>
// kernel: attention_block_forward.1
$region0: #{attention_block_forward.1}
  #allocation0 [shape = 'u32[]', space=smem, size = 0x4, offset = 0x4, fixed_abs, tag = 'smem constant byte address 0x4 - core index']
  #allocation1 [shape = 'u32[144,128]{1,0:T(1,128)}', space=vmem, size = 0x12000, scoped, tag = 'internal scratch']
  %s0 = inlined_call_operand.vmem [shape: f32[2,32,16], index: 0, kind: input, shape index: {}]
  %s1 = inlined_call_operand.vmem [shape: f32[88,48], index: 1, kind: input, shape index: {}]
  %s2 = inlined_call_operand.vmem [shape: f32[2,32,16], index: 2, kind: output, shape index: {}]
  %s3 = sld [smem:[#allocation0]]
  $region18: #{attention_block_forward.1} parent=0
    _
  %s5 = ssub.s32 1, %s3
  %s6 = scalar_select 0, %s5, %s3
  // Predicated region
  $region2: #{attention_block_forward.1} parent=0 // pred_check
    _
  $region3: #{attention_block_forward.1} parent=0 // pred_check_branch
    %8 = sbr.rel (0) target = $region5
  $region4: #{attention_block_forward.1} parent=0 // pred_region
    _
  $region5: #{attention_block_forward.1} parent=0 // pred_fallthru
    _
  // Predicated region
  $region6: #{attention_block_forward.1} parent=0 // pred_check
    _
  $region7: #{attention_block_forward.1} parent=0 // pred_check_branch
    %10 = sbr.rel (0) target = $region9
  $region8: #{attention_block_forward.1} parent=0 // pred_region
    _
  $region9: #{attention_block_forward.1} parent=0 // pred_fallthru
    _
  %v12 = vld [vmem:[%s1] sm:$0xff]
  %v13 = vld [vmem:[%s1 + $0x8] sm:$0xff]
  %v14 = vld [vmem:[%s1 + $0x10] sm:$0xff]
  %v15 = vld [vmem:[%s1 + $0x18] sm:$0xff]
  %v16 = vpack.c.bf16 %v13, %v12
  %v17 = vpack.c.bf16 %v15, %v14
  %v18 = vld [vmem:[%s1 + $0x20] sm:$0x1]
  %v19 = vld [vmem:[%s1 + $0x28] sm:$0xff]
  %v20 = vld [vmem:[%s1 + $0x30] sm:$0xff]
  %v21 = vld [vmem:[%s1 + $0x38] sm:$0xff]
  %v22 = vld [vmem:[%s1 + $0x40] sm:$0xff]
  %v23 = vpack.c.bf16 %v20, %v19
  %v24 = vpack.c.bf16 %v22, %v21
  %v25 = vld [vmem:[%s1 + $0x48] sm:$0xff]
  %v26 = vld [vmem:[%s1 + $0x50] sm:$0xff]
  %v27 = vpack.c.bf16 %v26, %v25
  %v28 = vld [vmem:[%s0] sm:$0xff]
  %v29 = vld [vmem:[%s0 + $0x8] sm:$0xff]
  %v30 = vld [vmem:[%s0 + $0x10] sm:$0xff]
  %v31 = vld [vmem:[%s0 + $0x18] sm:$0xff]
  %vm32 = vcmask 130048
  %v33 = vsel %vm32, %v28, 0.0
  %v34 = vsel %vm32, %v29, 0.0
  %v35 = vadd.f32 %v33, %v34
  %v36 = vsel %vm32, %v30, 0.0
  %v37 = vadd.f32 %v35, %v36
  %v38 = vsel %vm32, %v31, 0.0
  %v39 = vadd.f32 %v37, %v38
  %v40 = vrot.slane %v39, 4
  %v41 = vadd.f32 %v39, %v40
  %v42 = vrot.slane %v41, 2
  %v43 = vadd.f32 %v41, %v42
  %v44 = vrot.slane %v43, 1
  %v45 = vadd.f32 %v43, %v44
  %v46 = vrcp.pop 32.0
  %v47 = vmul.f32 %v45, %v46
  %v48 = vsub.f32 %v28, %v47
  %v49 = vsub.f32 %v29, %v47
  %v50 = vsub.f32 %v30, %v47
  %v51 = vsub.f32 %v31, %v47
  %v52 = vmul.f32 %v48, %v48
  %v53 = vmul.f32 %v49, %v49
  %v54 = vmul.f32 %v50, %v50
  %v55 = vmul.f32 %v51, %v51
  %v56 = vsel %vm32, %v52, 0.0
  %v57 = vsel %vm32, %v53, 0.0
  %v58 = vadd.f32 %v56, %v57
  %v59 = vsel %vm32, %v54, 0.0
  %v60 = vadd.f32 %v58, %v59
  %v61 = vsel %vm32, %v55, 0.0
  %v62 = vadd.f32 %v60, %v61
  %v63 = vrot.slane %v62, 4
  %v64 = vadd.f32 %v62, %v63
  %v65 = vrot.slane %v64, 2
  %v66 = vadd.f32 %v64, %v65
  %v67 = vrot.slane %v66, 1
  %v68 = vadd.f32 %v66, %v67
  %v69 = vmul.f32 %v68, %v46
  %v70 = vadd.f32 %v69, 1e-06
  %v71 = vrsqrt.pop %v70
  %v72 = vmul.f32 %v48, %v71
  %v73 = vmul.f32 %v49, %v71
  %v74 = vmul.f32 %v50, %v71
  %v75 = vmul.f32 %v51, %v71
  %v76 = vpack.c.bf16 %v73, %v72
  %v77 = vpack.c.bf16 %v75, %v74
  %v79 = vsel %vm32, %v27, 0
  %v82 = vsel %vm32, %v76, 0
  %v85 = vsel %vm32, %v77, 0
  %87 = vmatprep.subr.bf16.mxu0 0
  %88 = vmatpush1.bf16.xpose.msra.mxu0 %v82
  %89 = vmatprep.subr.bf16.mxu0 0
  %90 = vmatpush1.bf16.xpose.msra.mxu0 %v85
  %91 = vmatprep.subr.bf16.mxu0 0
  %92 = vmatpush1.bf16.xpose.msra.mxu0 0
  %93 = vmatprep.subr.bf16.mxu0 0
  %94 = vmatpush1.bf16.xpose.msra.mxu0 0
  %95 = vmatprep.subr.bf16.mxu0 0
  %96 = vmatpush1.bf16.xpose.msra.mxu0 0
  %97 = vmatprep.subr.bf16.mxu0 0
  %98 = vmatpush1.bf16.xpose.msra.mxu0 0
  %99 = vmatprep.subr.bf16.mxu0 0
  %100 = vmatpush1.bf16.xpose.msra.mxu0 0
  %101 = vmatprep.subr.bf16.mxu0 0
  %102 = vmatpush1.bf16.xpose.msra.mxu0 0
  %103 = vmatprep.subr.bf16.mxu0 0
  %104 = vmatpush1.bf16.xpose.msra.mxu0 0
  %105 = vmatprep.subr.bf16.mxu0 0
  %106 = vmatpush1.bf16.xpose.msra.mxu0 0
  %107 = vmatprep.subr.bf16.mxu0 0
  %108 = vmatpush1.bf16.xpose.msra.mxu0 0
  %109 = vmatprep.subr.bf16.mxu0 0
  %110 = vmatpush1.bf16.xpose.msra.mxu0 0
  %111 = vmatprep.subr.bf16.mxu0 0
  %112 = vmatpush1.bf16.xpose.msra.mxu0 0
  %113 = vmatprep.subr.bf16.mxu0 0
  %114 = vmatpush1.bf16.xpose.msra.mxu0 0
  %115 = vmatprep.subr.bf16.mxu0 0
  %116 = vmatpush1.bf16.xpose.msra.mxu0 0
  %117 = vmatprep.subr.bf16.mxu0 0
  %118 = vmatpush1.bf16.xpose.msra.mxu0 0
  %119 = vmatprep.mubr.bf16.mxu0 0
  %120 = vmatmul.mubr.bf16.gmra.mrb[0].mxu0 %v79
  %v121 = vpop.f32.mrb[0].mxu0
  %v122 = vadd.f32 0.0, %v121
  %v123 = vpop.f32.mrb[0].mxu0
  %v124 = vpop.f32.mrb[0].mxu0
  %v125 = vadd.f32 0.0, %v124
  %v126 = vpop.f32.mrb[0].mxu0
  %127 = vdwg.mxu0
  %v128 = vpack.c.bf16 %v125, %v122
  %v129 = vlaneseq
  %v130 = vshrl.u32 %v129, 7
  %v131 = vsub.s32 0, %v130
  %v132 = vrot.slane %v18, %v131
  %vm133 = vcmask 261120
  %v135 = vsel %vm133, %v128, 0
  %137 = vmatprep.subr.bf16.mxu0 0
  %138 = vmatpush1.bf16.msra.mxu0 %v16
  %139 = vmatprep.subr.bf16.mxu0 0
  %140 = vmatpush1.bf16.msra.mxu0 %v17
  %141 = vmatprep.subr.bf16.mxu0 0
  %142 = vmatpush1.bf16.msra.mxu0 0
  %143 = vmatprep.subr.bf16.mxu0 0
  %144 = vmatpush1.bf16.msra.mxu0 0
  %145 = vmatprep.subr.bf16.mxu0 0
  %146 = vmatpush1.bf16.msra.mxu0 0
  %147 = vmatprep.subr.bf16.mxu0 0
  %148 = vmatpush1.bf16.msra.mxu0 0
  %149 = vmatprep.subr.bf16.mxu0 0
  %150 = vmatpush1.bf16.msra.mxu0 0
  %151 = vmatprep.subr.bf16.mxu0 0
  %152 = vmatpush1.bf16.msra.mxu0 0
  %153 = vmatprep.subr.bf16.mxu0 0
  %154 = vmatpush1.bf16.msra.mxu0 0
  %155 = vmatprep.subr.bf16.mxu0 0
  %156 = vmatpush1.bf16.msra.mxu0 0
  %157 = vmatprep.subr.bf16.mxu0 0
  %158 = vmatpush1.bf16.msra.mxu0 0
  %159 = vmatprep.subr.bf16.mxu0 0
  %160 = vmatpush1.bf16.msra.mxu0 0
  %161 = vmatprep.subr.bf16.mxu0 0
  %162 = vmatpush1.bf16.msra.mxu0 0
  %163 = vmatprep.subr.bf16.mxu0 0
  %164 = vmatpush1.bf16.msra.mxu0 0
  %165 = vmatprep.subr.bf16.mxu0 0
  %166 = vmatpush1.bf16.msra.mxu0 0
  %167 = vmatprep.subr.bf16.mxu0 0
  %168 = vmatpush1.bf16.msra.mxu0 0
  %169 = vmatprep.mubr.bf16.mxu0 0
  %170 = vmatmul.mubr.bf16.gmra.mrb[0].mxu0 %v135
  %v171 = vpop.f32.mrb[0].mxu0
  %v172 = vadd.f32 %v132, %v171
  %v173 = vpop.f32.mrb[0].mxu0
  %v174 = vpop.f32.mrb[0].mxu0
  %v175 = vadd.f32 %v132, %v174
  %v176 = vpop.f32.mrb[0].mxu0
  %177 = vdwg.mxu0
  %v178 = vpack.c.bf16 %v175, %v172
  %180 = vrot.lane.b32.xlu0 %v178, 96
  %v181 = vpop.permute.xlu0 %180
  %vm182 = vcmask 64512
  %v184 = vsel %vm182, %v23, 0
  %v187 = vsel %vm182, %v24, 0
  %v190 = vsel %vm182, %v181, 0
  %192 = vmatprep.subr.bf16.mxu0 0
  %193 = vmatpush1.bf16.xpose.msra.mxu0 %v190
  %194 = vmatprep.subr.bf16.mxu0 0
  %195 = vmatpush1.bf16.xpose.msra.mxu0 0
  %196 = vmatprep.subr.bf16.mxu0 0
  %197 = vmatpush1.bf16.xpose.msra.mxu0 0
  %198 = vmatprep.subr.bf16.mxu0 0
  %199 = vmatpush1.bf16.xpose.msra.mxu0 0
  %200 = vmatprep.subr.bf16.mxu0 0
  %201 = vmatpush1.bf16.xpose.msra.mxu0 0
  %202 = vmatprep.subr.bf16.mxu0 0
  %203 = vmatpush1.bf16.xpose.msra.mxu0 0
  %204 = vmatprep.subr.bf16.mxu0 0
  %205 = vmatpush1.bf16.xpose.msra.mxu0 0
  %206 = vmatprep.subr.bf16.mxu0 0
  %207 = vmatpush1.bf16.xpose.msra.mxu0 0
  %208 = vmatprep.subr.bf16.mxu0 0
  %209 = vmatpush1.bf16.xpose.msra.mxu0 0
  %210 = vmatprep.subr.bf16.mxu0 0
  %211 = vmatpush1.bf16.xpose.msra.mxu0 0
  %212 = vmatprep.subr.bf16.mxu0 0
  %213 = vmatpush1.bf16.xpose.msra.mxu0 0
  %214 = vmatprep.subr.bf16.mxu0 0
  %215 = vmatpush1.bf16.xpose.msra.mxu0 0
  %216 = vmatprep.subr.bf16.mxu0 0
  %217 = vmatpush1.bf16.xpose.msra.mxu0 0
  %218 = vmatprep.subr.bf16.mxu0 0
  %219 = vmatpush1.bf16.xpose.msra.mxu0 0
  %220 = vmatprep.subr.bf16.mxu0 0
  %221 = vmatpush1.bf16.xpose.msra.mxu0 0
  %222 = vmatprep.subr.bf16.mxu0 0
  %223 = vmatpush1.bf16.xpose.msra.mxu0 0
  %224 = vmatprep.mubr.bf16.mxu0 0
  %225 = vmatmul.mubr.bf16.gmra.mrb[0].mxu0 %v184
  %v226 = vpop.f32.mrb[0].mxu0
  %v227 = vadd.f32 0.0, %v226
  %v228 = vpop.f32.mrb[0].mxu0
  %v229 = vpop.f32.mrb[0].mxu0
  %v230 = vadd.f32 0.0, %v229
  %v231 = vpop.f32.mrb[0].mxu0
  %232 = vmatprep.mubr.bf16.mxu0 0
  %233 = vmatmul.mubr.bf16.gmra.mrb[0].mxu0 %v187
  %v234 = vpop.f32.mrb[0].mxu0
  %v235 = vadd.f32 0.0, %v234
  %v236 = vpop.f32.mrb[0].mxu0
  %v237 = vpop.f32.mrb[0].mxu0
  %v238 = vadd.f32 0.0, %v237
  %v239 = vpop.f32.mrb[0].mxu0
  %240 = vdwg.mxu0
  %v241 = vpack.c.bf16 %v230, %v227
  %v242 = vpack.c.bf16 %v238, %v235
  %243 = vrot.lane.b32.xlu0 %v178, 112
  %v244 = vpop.permute.xlu0 %243
  %v246 = vsel %vm182, %v178, 0
  %v249 = vsel %vm182, %v244, 0
  %251 = vmatprep.subr.bf16.mxu0 0
  %252 = vmatpush1.bf16.xpose.msra.mxu0 %v249
  %253 = vmatprep.subr.bf16.mxu0 0
  %254 = vmatpush1.bf16.xpose.msra.mxu0 0
  %255 = vmatprep.subr.bf16.mxu0 0
  %256 = vmatpush1.bf16.xpose.msra.mxu0 0
  %257 = vmatprep.subr.bf16.mxu0 0
  %258 = vmatpush1.bf16.xpose.msra.mxu0 0
  %259 = vmatprep.subr.bf16.mxu0 0
  %260 = vmatpush1.bf16.xpose.msra.mxu0 0
  %261 = vmatprep.subr.bf16.mxu0 0
  %262 = vmatpush1.bf16.xpose.msra.mxu0 0
  %263 = vmatprep.subr.bf16.mxu0 0
  %264 = vmatpush1.bf16.xpose.msra.mxu0 0
  %265 = vmatprep.subr.bf16.mxu0 0
  %266 = vmatpush1.bf16.xpose.msra.mxu0 0
  %267 = vmatprep.subr.bf16.mxu0 0
  %268 = vmatpush1.bf16.xpose.msra.mxu0 0
  %269 = vmatprep.subr.bf16.mxu0 0
  %270 = vmatpush1.bf16.xpose.msra.mxu0 0
  %271 = vmatprep.subr.bf16.mxu0 0
  %272 = vmatpush1.bf16.xpose.msra.mxu0 0
  %273 = vmatprep.subr.bf16.mxu0 0
  %274 = vmatpush1.bf16.xpose.msra.mxu0 0
  %275 = vmatprep.subr.bf16.mxu0 0
  %276 = vmatpush1.bf16.xpose.msra.mxu0 0
  %277 = vmatprep.subr.bf16.mxu0 0
  %278 = vmatpush1.bf16.xpose.msra.mxu0 0
  %279 = vmatprep.subr.bf16.mxu0 0
  %280 = vmatpush1.bf16.xpose.msra.mxu0 0
  %281 = vmatprep.subr.bf16.mxu0 0
  %282 = vmatpush1.bf16.xpose.msra.mxu0 0
  %283 = vmatprep.mubr.bf16.mxu0 0
  %284 = vmatmul.mubr.bf16.gmra.mrb[0].mxu0 %v246
  %v285 = vpop.f32.mrb[0].mxu0
  %v286 = vadd.f32 0.0, %v285
  %v287 = vpop.f32.mrb[0].mxu0
  %v288 = vpop.f32.mrb[0].mxu0
  %v289 = vadd.f32 0.0, %v288
  %v290 = vpop.f32.mrb[0].mxu0
  %291 = vdwg.mxu0
  %v292 = vsel %vm32, %v286, -inf
  %293 = vmax.xlane.f32.xlu0 %v292
  %v294 = vpop.xlane.xlu0 %293
  %v295 = vsel %vm32, %v289, -inf
  %296 = vmax.xlane.f32.xlu0 %v295
  %v297 = vpop.xlane.xlu0 %296
  %v298 = vsub.f32 %v286, %v294
  %v299 = vsub.f32 %v289, %v297
  %v300 = vmul.f32 %v298, 1.442695
  %v301 = vpow.pop %v300
  %v302 = vmul.f32 %v299, 1.442695
  %v303 = vpow.pop %v302
  %v304 = vsel %vm32, %v301, 0.0
  %305 = vadd.xlane.f32.xlu0 %v304
  %v306 = vpop.xlane.xlu0 %305
  %v307 = vsel %vm32, %v303, 0.0
  %308 = vadd.xlane.f32.xlu0 %v307
  %v309 = vpop.xlane.xlu0 %308
  %v310 = vrcp.pop %v306
  %v311 = vrcp.pop %v309
  %v312 = vmul.f32 %v301, %v310
  %v313 = vmul.f32 %v303, %v311
  %v314 = vpack.c.bf16 %v313, %v312
  %317 = vrot.lane.b32.xlu0 %v23, 120
  %v318 = vpop.permute.xlu0 %317
  %319 = vrot.lane.b32.xlu0 %v24, 120
  %v320 = vpop.permute.xlu0 %319
  %321 = vrot.lane.b32.xlu0 %v178, 88
  %v322 = vpop.permute.xlu0 %321
  %v324 = vsel %vm182, %v318, 0
  %v327 = vsel %vm182, %v320, 0
  %v330 = vsel %vm182, %v322, 0
  %332 = vmatprep.subr.bf16.mxu0 0
  %333 = vmatpush1.bf16.xpose.msra.mxu0 %v330
  %334 = vmatprep.subr.bf16.mxu0 0
  %335 = vmatpush1.bf16.xpose.msra.mxu0 0
  %336 = vmatprep.subr.bf16.mxu0 0
  %337 = vmatpush1.bf16.xpose.msra.mxu0 0
  %338 = vmatprep.subr.bf16.mxu0 0
  %339 = vmatpush1.bf16.xpose.msra.mxu0 0
  %340 = vmatprep.subr.bf16.mxu0 0
  %341 = vmatpush1.bf16.xpose.msra.mxu0 0
  %342 = vmatprep.subr.bf16.mxu0 0
  %343 = vmatpush1.bf16.xpose.msra.mxu0 0
  %344 = vmatprep.subr.bf16.mxu0 0
  %345 = vmatpush1.bf16.xpose.msra.mxu0 0
  %346 = vmatprep.subr.bf16.mxu0 0
  %347 = vmatpush1.bf16.xpose.msra.mxu0 0
  %348 = vmatprep.subr.bf16.mxu0 0
  %349 = vmatpush1.bf16.xpose.msra.mxu0 0
  %350 = vmatprep.subr.bf16.mxu0 0
  %351 = vmatpush1.bf16.xpose.msra.mxu0 0
  %352 = vmatprep.subr.bf16.mxu0 0
  %353 = vmatpush1.bf16.xpose.msra.mxu0 0
  %354 = vmatprep.subr.bf16.mxu0 0
  %355 = vmatpush1.bf16.xpose.msra.mxu0 0
  %356 = vmatprep.subr.bf16.mxu0 0
  %357 = vmatpush1.bf16.xpose.msra.mxu0 0
  %358 = vmatprep.subr.bf16.mxu0 0
  %359 = vmatpush1.bf16.xpose.msra.mxu0 0
  %360 = vmatprep.subr.bf16.mxu0 0
  %361 = vmatpush1.bf16.xpose.msra.mxu0 0
  %362 = vmatprep.subr.bf16.mxu0 0
  %363 = vmatpush1.bf16.xpose.msra.mxu0 0
  %364 = vmatprep.mubr.bf16.mxu0 0
  %365 = vmatmul.mubr.bf16.gmra.mrb[0].mxu0 %v324
  %v366 = vpop.f32.mrb[0].mxu0
  %v367 = vadd.f32 0.0, %v366
  %v368 = vpop.f32.mrb[0].mxu0
  %v369 = vpop.f32.mrb[0].mxu0
  %v370 = vadd.f32 0.0, %v369
  %v371 = vpop.f32.mrb[0].mxu0
  %372 = vmatprep.mubr.bf16.mxu0 0
  %373 = vmatmul.mubr.bf16.gmra.mrb[0].mxu0 %v327
  %v374 = vpop.f32.mrb[0].mxu0
  %v375 = vadd.f32 0.0, %v374
  %v376 = vpop.f32.mrb[0].mxu0
  %v377 = vpop.f32.mrb[0].mxu0
  %v378 = vadd.f32 0.0, %v377
  %v379 = vpop.f32.mrb[0].mxu0
  %380 = vdwg.mxu0
  %v381 = vpack.c.bf16 %v370, %v367
  %v382 = vpack.c.bf16 %v378, %v375
  %383 = vrot.lane.b32.xlu0 %v178, 120
  %v384 = vpop.permute.xlu0 %383
  %385 = vrot.lane.b32.xlu0 %v178, 104
  %v386 = vpop.permute.xlu0 %385
  %v388 = vsel %vm182, %v384, 0
  %v391 = vsel %vm182, %v386, 0
  %393 = vmatprep.subr.bf16.mxu0 0
  %394 = vmatpush1.bf16.xpose.msra.mxu0 %v391
  %395 = vmatprep.subr.bf16.mxu0 0
  %396 = vmatpush1.bf16.xpose.msra.mxu0 0
  %397 = vmatprep.subr.bf16.mxu0 0
  %398 = vmatpush1.bf16.xpose.msra.mxu0 0
  %399 = vmatprep.subr.bf16.mxu0 0
  %400 = vmatpush1.bf16.xpose.msra.mxu0 0
  %401 = vmatprep.subr.bf16.mxu0 0
  %402 = vmatpush1.bf16.xpose.msra.mxu0 0
  %403 = vmatprep.subr.bf16.mxu0 0
  %404 = vmatpush1.bf16.xpose.msra.mxu0 0
  %405 = vmatprep.subr.bf16.mxu0 0
  %406 = vmatpush1.bf16.xpose.msra.mxu0 0
  %407 = vmatprep.subr.bf16.mxu0 0
  %408 = vmatpush1.bf16.xpose.msra.mxu0 0
  %409 = vmatprep.subr.bf16.mxu0 0
  %410 = vmatpush1.bf16.xpose.msra.mxu0 0
  %411 = vmatprep.subr.bf16.mxu0 0
  %412 = vmatpush1.bf16.xpose.msra.mxu0 0
  %413 = vmatprep.subr.bf16.mxu0 0
  %414 = vmatpush1.bf16.xpose.msra.mxu0 0
  %415 = vmatprep.subr.bf16.mxu0 0
  %416 = vmatpush1.bf16.xpose.msra.mxu0 0
  %417 = vmatprep.subr.bf16.mxu0 0
  %418 = vmatpush1.bf16.xpose.msra.mxu0 0
  %419 = vmatprep.subr.bf16.mxu0 0
  %420 = vmatpush1.bf16.xpose.msra.mxu0 0
  %421 = vmatprep.subr.bf16.mxu0 0
  %422 = vmatpush1.bf16.xpose.msra.mxu0 0
  %423 = vmatprep.subr.bf16.mxu0 0
  %424 = vmatpush1.bf16.xpose.msra.mxu0 0
  %425 = vmatprep.mubr.bf16.mxu0 0
  %426 = vmatmul.mubr.bf16.gmra.mrb[0].mxu0 %v388
  %v427 = vpop.f32.mrb[0].mxu0
  %v428 = vadd.f32 0.0, %v427
  %v429 = vpop.f32.mrb[0].mxu0
  %v430 = vpop.f32.mrb[0].mxu0
  %v431 = vadd.f32 0.0, %v430
  %v432 = vpop.f32.mrb[0].mxu0
  %433 = vdwg.mxu0
  %v434 = vsel %vm32, %v428, -inf
  %435 = vmax.xlane.f32.xlu0 %v434
  %v436 = vpop.xlane.xlu0 %435
  %v437 = vsel %vm32, %v431, -inf
  %438 = vmax.xlane.f32.xlu0 %v437
  %v439 = vpop.xlane.xlu0 %438
  %v440 = vsub.f32 %v428, %v436
  %v441 = vsub.f32 %v431, %v439
  %v442 = vmul.f32 %v440, 1.442695
  %v443 = vpow.pop %v442
  %v444 = vmul.f32 %v441, 1.442695
  %v445 = vpow.pop %v444
  %v446 = vsel %vm32, %v443, 0.0
  %447 = vadd.xlane.f32.xlu0 %v446
  %v448 = vpop.xlane.xlu0 %447
  %v449 = vsel %vm32, %v445, 0.0
  %450 = vadd.xlane.f32.xlu0 %v449
  %v451 = vpop.xlane.xlu0 %450
  %v452 = vrcp.pop %v448
  %v453 = vrcp.pop %v451
  %v454 = vmul.f32 %v443, %v452
  %v455 = vmul.f32 %v445, %v453
  %v456 = vpack.c.bf16 %v455, %v454
  %v458 = vsel %vm32, %v381, 0
  %v461 = vsel %vm32, %v382, 0
  %v464 = vsel %vm32, %v456, 0
  %466 = vmatprep.subr.bf16.mxu0 0
  %467 = vmatpush1.bf16.xpose.msra.mxu0 %v464
  %468 = vmatprep.subr.bf16.mxu0 0
  %469 = vmatpush1.bf16.xpose.msra.mxu0 0
  %470 = vmatprep.subr.bf16.mxu0 0
  %471 = vmatpush1.bf16.xpose.msra.mxu0 0
  %472 = vmatprep.subr.bf16.mxu0 0
  %473 = vmatpush1.bf16.xpose.msra.mxu0 0
  %474 = vmatprep.subr.bf16.mxu0 0
  %475 = vmatpush1.bf16.xpose.msra.mxu0 0
  %476 = vmatprep.subr.bf16.mxu0 0
  %477 = vmatpush1.bf16.xpose.msra.mxu0 0
  %478 = vmatprep.subr.bf16.mxu0 0
  %479 = vmatpush1.bf16.xpose.msra.mxu0 0
  %480 = vmatprep.subr.bf16.mxu0 0
  %481 = vmatpush1.bf16.xpose.msra.mxu0 0
  %482 = vmatprep.subr.bf16.mxu0 0
  %483 = vmatpush1.bf16.xpose.msra.mxu0 0
  %484 = vmatprep.subr.bf16.mxu0 0
  %485 = vmatpush1.bf16.xpose.msra.mxu0 0
  %486 = vmatprep.subr.bf16.mxu0 0
  %487 = vmatpush1.bf16.xpose.msra.mxu0 0
  %488 = vmatprep.subr.bf16.mxu0 0
  %489 = vmatpush1.bf16.xpose.msra.mxu0 0
  %490 = vmatprep.subr.bf16.mxu0 0
  %491 = vmatpush1.bf16.xpose.msra.mxu0 0
  %492 = vmatprep.subr.bf16.mxu0 0
  %493 = vmatpush1.bf16.xpose.msra.mxu0 0
  %494 = vmatprep.subr.bf16.mxu0 0
  %495 = vmatpush1.bf16.xpose.msra.mxu0 0
  %496 = vmatprep.subr.bf16.mxu0 0
  %497 = vmatpush1.bf16.xpose.msra.mxu0 0
  %498 = vmatprep.mubr.bf16.mxu0 0
  %499 = vmatmul.mubr.bf16.gmra.mrb[0].mxu0 %v458
  %v500 = vpop.f32.mrb[0].mxu0
  %v501 = vadd.f32 0.0, %v500
  %v502 = vpop.f32.mrb[0].mxu0
  %v503 = vpop.f32.mrb[0].mxu0
  %v504 = vadd.f32 0.0, %v503
  %v505 = vpop.f32.mrb[0].mxu0
  %506 = vmatprep.mubr.bf16.mxu0 0
  %507 = vmatmul.mubr.bf16.gmra.mrb[0].mxu0 %v461
  %v508 = vpop.f32.mrb[0].mxu0
  %v509 = vadd.f32 0.0, %v508
  %v510 = vpop.f32.mrb[0].mxu0
  %v511 = vpop.f32.mrb[0].mxu0
  %v512 = vadd.f32 0.0, %v511
  %v513 = vpop.f32.mrb[0].mxu0
  %514 = vdwg.mxu0
  %v516 = vsel %vm32, %v241, 0
  %v519 = vsel %vm32, %v242, 0
  %v522 = vsel %vm32, %v314, 0
  %524 = vmatprep.subr.bf16.mxu0 0
  %525 = vmatpush1.bf16.xpose.msra.mxu0 %v522
  %526 = vmatprep.subr.bf16.mxu0 0
  %527 = vmatpush1.bf16.xpose.msra.mxu0 0
  %528 = vmatprep.subr.bf16.mxu0 0
  %529 = vmatpush1.bf16.xpose.msra.mxu0 0
  %530 = vmatprep.subr.bf16.mxu0 0
  %531 = vmatpush1.bf16.xpose.msra.mxu0 0
  %532 = vmatprep.subr.bf16.mxu0 0
  %533 = vmatpush1.bf16.xpose.msra.mxu0 0
  %534 = vmatprep.subr.bf16.mxu0 0
  %535 = vmatpush1.bf16.xpose.msra.mxu0 0
  %536 = vmatprep.subr.bf16.mxu0 0
  %537 = vmatpush1.bf16.xpose.msra.mxu0 0
  %538 = vmatprep.subr.bf16.mxu0 0
  %539 = vmatpush1.bf16.xpose.msra.mxu0 0
  %540 = vmatprep.subr.bf16.mxu0 0
  %541 = vmatpush1.bf16.xpose.msra.mxu0 0
  %542 = vmatprep.subr.bf16.mxu0 0
  %543 = vmatpush1.bf16.xpose.msra.mxu0 0
  %544 = vmatprep.subr.bf16.mxu0 0
  %545 = vmatpush1.bf16.xpose.msra.mxu0 0
  %546 = vmatprep.subr.bf16.mxu0 0
  %547 = vmatpush1.bf16.xpose.msra.mxu0 0
  %548 = vmatprep.subr.bf16.mxu0 0
  %549 = vmatpush1.bf16.xpose.msra.mxu0 0
  %550 = vmatprep.subr.bf16.mxu0 0
  %551 = vmatpush1.bf16.xpose.msra.mxu0 0
  %552 = vmatprep.subr.bf16.mxu0 0
  %553 = vmatpush1.bf16.xpose.msra.mxu0 0
  %554 = vmatprep.subr.bf16.mxu0 0
  %555 = vmatpush1.bf16.xpose.msra.mxu0 0
  %556 = vmatprep.mubr.bf16.mxu0 0
  %557 = vmatmul.mubr.bf16.gmra.mrb[0].mxu0 %v516
  %v558 = vpop.f32.mrb[0].mxu0
  %v559 = vadd.f32 %v501, %v558
  %v560 = vpop.f32.mrb[0].mxu0
  %v561 = vpop.f32.mrb[0].mxu0
  %v562 = vadd.f32 %v504, %v561
  %v563 = vpop.f32.mrb[0].mxu0
  %564 = vmatprep.mubr.bf16.mxu0 0
  %565 = vmatmul.mubr.bf16.gmra.mrb[0].mxu0 %v519
  %v566 = vpop.f32.mrb[0].mxu0
  %v567 = vadd.f32 %v509, %v566
  %v568 = vpop.f32.mrb[0].mxu0
  %v569 = vpop.f32.mrb[0].mxu0
  %v570 = vadd.f32 %v512, %v569
  %v571 = vpop.f32.mrb[0].mxu0
  %572 = vdwg.mxu0
  %v573 = vadd.f32 %v28, %v559
  %v574 = vadd.f32 %v29, %v562
  %v575 = vadd.f32 %v30, %v567
  %v576 = vadd.f32 %v31, %v570
  %578 = vset.pattern.permute.xlu0 16
  %579 = vperm.xlu0 %578, %v19
  %v580 = vpop.permute.xlu0 %579
  %583 = vset.pattern.permute.xlu0 16
  %584 = vperm.xlu0 %583, %v20
  %v585 = vpop.permute.xlu0 %584
  %588 = vset.pattern.permute.xlu0 16
  %589 = vperm.xlu0 %588, %v21
  %v590 = vpop.permute.xlu0 %589
  %593 = vset.pattern.permute.xlu0 16
  %594 = vperm.xlu0 %593, %v22
  %v595 = vpop.permute.xlu0 %594
  %v597 = vadd.f32 %v573, %v580
  %v598 = vadd.f32 %v574, %v585
  %v599 = vadd.f32 %v575, %v590
  %v600 = vadd.f32 %v576, %v595
  %601 = vst.msk [vmem:[%s2] sm:$0xff] %vm32, %v597
  %602 = vst.msk [vmem:[%s2 + $0x8] sm:$0xff] %vm32, %v598
  %603 = vst.msk [vmem:[%s2 + $0x10] sm:$0xff] %vm32, %v599
  %604 = vst.msk [vmem:[%s2 + $0x18] sm:$0xff] %vm32, %v600
  %s605 = scalar_lea.vmem %s0, 32
  %v606 = vld [vmem:[%s605] sm:$0xff]
  %v607 = vld [vmem:[%s605 + $0x8] sm:$0xff]
  %v608 = vld [vmem:[%s605 + $0x10] sm:$0xff]
  %v609 = vld [vmem:[%s605 + $0x18] sm:$0xff]
  %v610 = vsel %vm32, %v606, 0.0
  %v611 = vsel %vm32, %v607, 0.0
  %v612 = vadd.f32 %v610, %v611
  %v613 = vsel %vm32, %v608, 0.0
  %v614 = vadd.f32 %v612, %v613
  %v615 = vsel %vm32, %v609, 0.0
  %v616 = vadd.f32 %v614, %v615
  %v617 = vrot.slane %v616, 4
  %v618 = vadd.f32 %v616, %v617
  %v619 = vrot.slane %v618, 2
  %v620 = vadd.f32 %v618, %v619
  %v621 = vrot.slane %v620, 1
  %v622 = vadd.f32 %v620, %v621
  %v623 = vmul.f32 %v622, %v46
  %v624 = vsub.f32 %v606, %v623
  %v625 = vsub.f32 %v607, %v623
  %v626 = vsub.f32 %v608, %v623
  %v627 = vsub.f32 %v609, %v623
  %v628 = vmul.f32 %v624, %v624
  %v629 = vmul.f32 %v625, %v625
  %v630 = vmul.f32 %v626, %v626
  %v631 = vmul.f32 %v627, %v627
  %v632 = vsel %vm32, %v628, 0.0
  %v633 = vsel %vm32, %v629, 0.0
  %v634 = vadd.f32 %v632, %v633
  %v635 = vsel %vm32, %v630, 0.0
  %v636 = vadd.f32 %v634, %v635
  %v637 = vsel %vm32, %v631, 0.0
  %v638 = vadd.f32 %v636, %v637
  %v639 = vrot.slane %v638, 4
  %v640 = vadd.f32 %v638, %v639
  %v641 = vrot.slane %v640, 2
  %v642 = vadd.f32 %v640, %v641
  %v643 = vrot.slane %v642, 1
  %v644 = vadd.f32 %v642, %v643
  %v645 = vmul.f32 %v644, %v46
  %v646 = vadd.f32 %v645, 1e-06
  %v647 = vrsqrt.pop %v646
  %v648 = vmul.f32 %v624, %v647
  %v649 = vmul.f32 %v625, %v647
  %v650 = vmul.f32 %v626, %v647
  %v651 = vmul.f32 %v627, %v647
  %v652 = vpack.c.bf16 %v649, %v648
  %v653 = vpack.c.bf16 %v651, %v650
  %v655 = vsel %vm32, %v652, 0
  %v658 = vsel %vm32, %v653, 0
  %660 = vmatprep.subr.bf16.mxu0 0
  %661 = vmatpush1.bf16.xpose.msra.mxu0 %v655
  %662 = vmatprep.subr.bf16.mxu0 0
  %663 = vmatpush1.bf16.xpose.msra.mxu0 %v658
  %664 = vmatprep.subr.bf16.mxu0 0
  %665 = vmatpush1.bf16.xpose.msra.mxu0 0
  %666 = vmatprep.subr.bf16.mxu0 0
  %667 = vmatpush1.bf16.xpose.msra.mxu0 0
  %668 = vmatprep.subr.bf16.mxu0 0
  %669 = vmatpush1.bf16.xpose.msra.mxu0 0
  %670 = vmatprep.subr.bf16.mxu0 0
  %671 = vmatpush1.bf16.xpose.msra.mxu0 0
  %672 = vmatprep.subr.bf16.mxu0 0
  %673 = vmatpush1.bf16.xpose.msra.mxu0 0
  %674 = vmatprep.subr.bf16.mxu0 0
  %675 = vmatpush1.bf16.xpose.msra.mxu0 0
  %676 = vmatprep.subr.bf16.mxu0 0
  %677 = vmatpush1.bf16.xpose.msra.mxu0 0
  %678 = vmatprep.subr.bf16.mxu0 0
  %679 = vmatpush1.bf16.xpose.msra.mxu0 0
  %680 = vmatprep.subr.bf16.mxu0 0
  %681 = vmatpush1.bf16.xpose.msra.mxu0 0
  %682 = vmatprep.subr.bf16.mxu0 0
  %683 = vmatpush1.bf16.xpose.msra.mxu0 0
  %684 = vmatprep.subr.bf16.mxu0 0
  %685 = vmatpush1.bf16.xpose.msra.mxu0 0
  %686 = vmatprep.subr.bf16.mxu0 0
  %687 = vmatpush1.bf16.xpose.msra.mxu0 0
  %688 = vmatprep.subr.bf16.mxu0 0
  %689 = vmatpush1.bf16.xpose.msra.mxu0 0
  %690 = vmatprep.subr.bf16.mxu0 0
  %691 = vmatpush1.bf16.xpose.msra.mxu0 0
  %692 = vmatprep.mubr.bf16.mxu0 0
  %693 = vmatmul.mubr.bf16.gmra.mrb[0].mxu0 %v79
  %v694 = vpop.f32.mrb[0].mxu0
  %v695 = vadd.f32 0.0, %v694
  %v696 = vpop.f32.mrb[0].mxu0
  %v697 = vpop.f32.mrb[0].mxu0
  %v698 = vadd.f32 0.0, %v697
  %v699 = vpop.f32.mrb[0].mxu0
  %700 = vdwg.mxu0
  %v701 = vpack.c.bf16 %v698, %v695
  %v703 = vsel %vm133, %v701, 0
  %705 = vmatprep.subr.bf16.mxu0 0
  %706 = vmatpush1.bf16.msra.mxu0 %v16
  %707 = vmatprep.subr.bf16.mxu0 0
  %708 = vmatpush1.bf16.msra.mxu0 %v17
  %709 = vmatprep.subr.bf16.mxu0 0
  %710 = vmatpush1.bf16.msra.mxu0 0
  %711 = vmatprep.subr.bf16.mxu0 0
  %712 = vmatpush1.bf16.msra.mxu0 0
  %713 = vmatprep.subr.bf16.mxu0 0
  %714 = vmatpush1.bf16.msra.mxu0 0
  %715 = vmatprep.subr.bf16.mxu0 0
  %716 = vmatpush1.bf16.msra.mxu0 0
  %717 = vmatprep.subr.bf16.mxu0 0
  %718 = vmatpush1.bf16.msra.mxu0 0
  %719 = vmatprep.subr.bf16.mxu0 0
  %720 = vmatpush1.bf16.msra.mxu0 0
  %721 = vmatprep.subr.bf16.mxu0 0
  %722 = vmatpush1.bf16.msra.mxu0 0
  %723 = vmatprep.subr.bf16.mxu0 0
  %724 = vmatpush1.bf16.msra.mxu0 0
  %725 = vmatprep.subr.bf16.mxu0 0
  %726 = vmatpush1.bf16.msra.mxu0 0
  %727 = vmatprep.subr.bf16.mxu0 0
  %728 = vmatpush1.bf16.msra.mxu0 0
  %729 = vmatprep.subr.bf16.mxu0 0
  %730 = vmatpush1.bf16.msra.mxu0 0
  %731 = vmatprep.subr.bf16.mxu0 0
  %732 = vmatpush1.bf16.msra.mxu0 0
  %733 = vmatprep.subr.bf16.mxu0 0
  %734 = vmatpush1.bf16.msra.mxu0 0
  %735 = vmatprep.subr.bf16.mxu0 0
  %736 = vmatpush1.bf16.msra.mxu0 0
  %737 = vmatprep.mubr.bf16.mxu0 0
  %738 = vmatmul.mubr.bf16.gmra.mrb[0].mxu0 %v703
  %v739 = vpop.f32.mrb[0].mxu0
  %v740 = vadd.f32 %v132, %v739
  %v741 = vpop.f32.mrb[0].mxu0
  %v742 = vpop.f32.mrb[0].mxu0
  %v743 = vadd.f32 %v132, %v742
  %v744 = vpop.f32.mrb[0].mxu0
  %745 = vdwg.mxu0
  %v746 = vpack.c.bf16 %v743, %v740
  %748 = vrot.lane.b32.xlu0 %v746, 96
  %v749 = vpop.permute.xlu0 %748
  %v751 = vsel %vm182, %v749, 0
  %753 = vmatprep.subr.bf16.mxu0 0
  %754 = vmatpush1.bf16.xpose.msra.mxu0 %v751
  %755 = vmatprep.subr.bf16.mxu0 0
  %756 = vmatpush1.bf16.xpose.msra.mxu0 0
  %757 = vmatprep.subr.bf16.mxu0 0
  %758 = vmatpush1.bf16.xpose.msra.mxu0 0
  %759 = vmatprep.subr.bf16.mxu0 0
  %760 = vmatpush1.bf16.xpose.msra.mxu0 0
  %761 = vmatprep.subr.bf16.mxu0 0
  %762 = vmatpush1.bf16.xpose.msra.mxu0 0
  %763 = vmatprep.subr.bf16.mxu0 0
  %764 = vmatpush1.bf16.xpose.msra.mxu0 0
  %765 = vmatprep.subr.bf16.mxu0 0
  %766 = vmatpush1.bf16.xpose.msra.mxu0 0
  %767 = vmatprep.subr.bf16.mxu0 0
  %768 = vmatpush1.bf16.xpose.msra.mxu0 0
  %769 = vmatprep.subr.bf16.mxu0 0
  %770 = vmatpush1.bf16.xpose.msra.mxu0 0
  %771 = vmatprep.subr.bf16.mxu0 0
  %772 = vmatpush1.bf16.xpose.msra.mxu0 0
  %773 = vmatprep.subr.bf16.mxu0 0
  %774 = vmatpush1.bf16.xpose.msra.mxu0 0
  %775 = vmatprep.subr.bf16.mxu0 0
  %776 = vmatpush1.bf16.xpose.msra.mxu0 0
  %777 = vmatprep.subr.bf16.mxu0 0
  %778 = vmatpush1.bf16.xpose.msra.mxu0 0
  %779 = vmatprep.subr.bf16.mxu0 0
  %780 = vmatpush1.bf16.xpose.msra.mxu0 0
  %781 = vmatprep.subr.bf16.mxu0 0
  %782 = vmatpush1.bf16.xpose.msra.mxu0 0
  %783 = vmatprep.subr.bf16.mxu0 0
  %784 = vmatpush1.bf16.xpose.msra.mxu0 0
  %785 = vmatprep.mubr.bf16.mxu0 0
  %786 = vmatmul.mubr.bf16.gmra.mrb[0].mxu0 %v184
  %v787 = vpop.f32.mrb[0].mxu0
  %v788 = vadd.f32 0.0, %v787
  %v789 = vpop.f32.mrb[0].mxu0
  %v790 = vpop.f32.mrb[0].mxu0
  %v791 = vadd.f32 0.0, %v790
  %v792 = vpop.f32.mrb[0].mxu0
  %793 = vmatprep.mubr.bf16.mxu0 0
  %794 = vmatmul.mubr.bf16.gmra.mrb[0].mxu0 %v187
  %v795 = vpop.f32.mrb[0].mxu0
  %v796 = vadd.f32 0.0, %v795
  %v797 = vpop.f32.mrb[0].mxu0
  %v798 = vpop.f32.mrb[0].mxu0
  %v799 = vadd.f32 0.0, %v798
  %v800 = vpop.f32.mrb[0].mxu0
  %801 = vdwg.mxu0
  %v802 = vpack.c.bf16 %v791, %v788
  %v803 = vpack.c.bf16 %v799, %v796
  %804 = vrot.lane.b32.xlu0 %v746, 112
  %v805 = vpop.permute.xlu0 %804
  %v807 = vsel %vm182, %v746, 0
  %v810 = vsel %vm182, %v805, 0
  %812 = vmatprep.subr.bf16.mxu0 0
  %813 = vmatpush1.bf16.xpose.msra.mxu0 %v810
  %814 = vmatprep.subr.bf16.mxu0 0
  %815 = vmatpush1.bf16.xpose.msra.mxu0 0
  %816 = vmatprep.subr.bf16.mxu0 0
  %817 = vmatpush1.bf16.xpose.msra.mxu0 0
  %818 = vmatprep.subr.bf16.mxu0 0
  %819 = vmatpush1.bf16.xpose.msra.mxu0 0
  %820 = vmatprep.subr.bf16.mxu0 0
  %821 = vmatpush1.bf16.xpose.msra.mxu0 0
  %822 = vmatprep.subr.bf16.mxu0 0
  %823 = vmatpush1.bf16.xpose.msra.mxu0 0
  %824 = vmatprep.subr.bf16.mxu0 0
  %825 = vmatpush1.bf16.xpose.msra.mxu0 0
  %826 = vmatprep.subr.bf16.mxu0 0
  %827 = vmatpush1.bf16.xpose.msra.mxu0 0
  %828 = vmatprep.subr.bf16.mxu0 0
  %829 = vmatpush1.bf16.xpose.msra.mxu0 0
  %830 = vmatprep.subr.bf16.mxu0 0
  %831 = vmatpush1.bf16.xpose.msra.mxu0 0
  %832 = vmatprep.subr.bf16.mxu0 0
  %833 = vmatpush1.bf16.xpose.msra.mxu0 0
  %834 = vmatprep.subr.bf16.mxu0 0
  %835 = vmatpush1.bf16.xpose.msra.mxu0 0
  %836 = vmatprep.subr.bf16.mxu0 0
  %837 = vmatpush1.bf16.xpose.msra.mxu0 0
  %838 = vmatprep.subr.bf16.mxu0 0
  %839 = vmatpush1.bf16.xpose.msra.mxu0 0
  %840 = vmatprep.subr.bf16.mxu0 0
  %841 = vmatpush1.bf16.xpose.msra.mxu0 0
  %842 = vmatprep.subr.bf16.mxu0 0
  %843 = vmatpush1.bf16.xpose.msra.mxu0 0
  %844 = vmatprep.mubr.bf16.mxu0 0
  %845 = vmatmul.mubr.bf16.gmra.mrb[0].mxu0 %v807
  %v846 = vpop.f32.mrb[0].mxu0
  %v847 = vadd.f32 0.0, %v846
  %v848 = vpop.f32.mrb[0].mxu0
  %v849 = vpop.f32.mrb[0].mxu0
  %v850 = vadd.f32 0.0, %v849
  %v851 = vpop.f32.mrb[0].mxu0
  %852 = vdwg.mxu0
  %v853 = vsel %vm32, %v847, -inf
  %854 = vmax.xlane.f32.xlu0 %v853
  %v855 = vpop.xlane.xlu0 %854
  %v856 = vsel %vm32, %v850, -inf
  %857 = vmax.xlane.f32.xlu0 %v856
  %v858 = vpop.xlane.xlu0 %857
  %v859 = vsub.f32 %v847, %v855
  %v860 = vsub.f32 %v850, %v858
  %v861 = vmul.f32 %v859, 1.442695
  %v862 = vpow.pop %v861
  %v863 = vmul.f32 %v860, 1.442695
  %v864 = vpow.pop %v863
  %v865 = vsel %vm32, %v862, 0.0
  %866 = vadd.xlane.f32.xlu0 %v865
  %v867 = vpop.xlane.xlu0 %866
  %v868 = vsel %vm32, %v864, 0.0
  %869 = vadd.xlane.f32.xlu0 %v868
  %v870 = vpop.xlane.xlu0 %869
  %v871 = vrcp.pop %v867
  %v872 = vrcp.pop %v870
  %v873 = vmul.f32 %v862, %v871
  %v874 = vmul.f32 %v864, %v872
  %v875 = vpack.c.bf16 %v874, %v873
  %876 = vrot.lane.b32.xlu0 %v746, 88
  %v877 = vpop.permute.xlu0 %876
  %v879 = vsel %vm182, %v877, 0
  %881 = vmatprep.subr.bf16.mxu0 0
  %882 = vmatpush1.bf16.xpose.msra.mxu0 %v879
  %883 = vmatprep.subr.bf16.mxu0 0
  %884 = vmatpush1.bf16.xpose.msra.mxu0 0
  %885 = vmatprep.subr.bf16.mxu0 0
  %886 = vmatpush1.bf16.xpose.msra.mxu0 0
  %887 = vmatprep.subr.bf16.mxu0 0
  %888 = vmatpush1.bf16.xpose.msra.mxu0 0
  %889 = vmatprep.subr.bf16.mxu0 0
  %890 = vmatpush1.bf16.xpose.msra.mxu0 0
  %891 = vmatprep.subr.bf16.mxu0 0
  %892 = vmatpush1.bf16.xpose.msra.mxu0 0
  %893 = vmatprep.subr.bf16.mxu0 0
  %894 = vmatpush1.bf16.xpose.msra.mxu0 0
  %895 = vmatprep.subr.bf16.mxu0 0
  %896 = vmatpush1.bf16.xpose.msra.mxu0 0
  %897 = vmatprep.subr.bf16.mxu0 0
  %898 = vmatpush1.bf16.xpose.msra.mxu0 0
  %899 = vmatprep.subr.bf16.mxu0 0
  %900 = vmatpush1.bf16.xpose.msra.mxu0 0
  %901 = vmatprep.subr.bf16.mxu0 0
  %902 = vmatpush1.bf16.xpose.msra.mxu0 0
  %903 = vmatprep.subr.bf16.mxu0 0
  %904 = vmatpush1.bf16.xpose.msra.mxu0 0
  %905 = vmatprep.subr.bf16.mxu0 0
  %906 = vmatpush1.bf16.xpose.msra.mxu0 0
  %907 = vmatprep.subr.bf16.mxu0 0
  %908 = vmatpush1.bf16.xpose.msra.mxu0 0
  %909 = vmatprep.subr.bf16.mxu0 0
  %910 = vmatpush1.bf16.xpose.msra.mxu0 0
  %911 = vmatprep.subr.bf16.mxu0 0
  %912 = vmatpush1.bf16.xpose.msra.mxu0 0
  %913 = vmatprep.mubr.bf16.mxu0 0
  %914 = vmatmul.mubr.bf16.gmra.mrb[0].mxu0 %v324
  %v915 = vpop.f32.mrb[0].mxu0
  %v916 = vadd.f32 0.0, %v915
  %v917 = vpop.f32.mrb[0].mxu0
  %v918 = vpop.f32.mrb[0].mxu0
  %v919 = vadd.f32 0.0, %v918
  %v920 = vpop.f32.mrb[0].mxu0
  %921 = vmatprep.mubr.bf16.mxu0 0
  %922 = vmatmul.mubr.bf16.gmra.mrb[0].mxu0 %v327
  %v923 = vpop.f32.mrb[0].mxu0
  %v924 = vadd.f32 0.0, %v923
  %v925 = vpop.f32.mrb[0].mxu0
  %v926 = vpop.f32.mrb[0].mxu0
  %v927 = vadd.f32 0.0, %v926
  %v928 = vpop.f32.mrb[0].mxu0
  %929 = vdwg.mxu0
  %v930 = vpack.c.bf16 %v919, %v916
  %v931 = vpack.c.bf16 %v927, %v924
  %932 = vrot.lane.b32.xlu0 %v746, 120
  %v933 = vpop.permute.xlu0 %932
  %934 = vrot.lane.b32.xlu0 %v746, 104
  %v935 = vpop.permute.xlu0 %934
  %v937 = vsel %vm182, %v933, 0
  %v940 = vsel %vm182, %v935, 0
  %942 = vmatprep.subr.bf16.mxu0 0
  %943 = vmatpush1.bf16.xpose.msra.mxu0 %v940
  %944 = vmatprep.subr.bf16.mxu0 0
  %945 = vmatpush1.bf16.xpose.msra.mxu0 0
  %946 = vmatprep.subr.bf16.mxu0 0
  %947 = vmatpush1.bf16.xpose.msra.mxu0 0
  %948 = vmatprep.subr.bf16.mxu0 0
  %949 = vmatpush1.bf16.xpose.msra.mxu0 0
  %950 = vmatprep.subr.bf16.mxu0 0
  %951 = vmatpush1.bf16.xpose.msra.mxu0 0
  %952 = vmatprep.subr.bf16.mxu0 0
  %953 = vmatpush1.bf16.xpose.msra.mxu0 0
  %954 = vmatprep.subr.bf16.mxu0 0
  %955 = vmatpush1.bf16.xpose.msra.mxu0 0
  %956 = vmatprep.subr.bf16.mxu0 0
  %957 = vmatpush1.bf16.xpose.msra.mxu0 0
  %958 = vmatprep.subr.bf16.mxu0 0
  %959 = vmatpush1.bf16.xpose.msra.mxu0 0
  %960 = vmatprep.subr.bf16.mxu0 0
  %961 = vmatpush1.bf16.xpose.msra.mxu0 0
  %962 = vmatprep.subr.bf16.mxu0 0
  %963 = vmatpush1.bf16.xpose.msra.mxu0 0
  %964 = vmatprep.subr.bf16.mxu0 0
  %965 = vmatpush1.bf16.xpose.msra.mxu0 0
  %966 = vmatprep.subr.bf16.mxu0 0
  %967 = vmatpush1.bf16.xpose.msra.mxu0 0
  %968 = vmatprep.subr.bf16.mxu0 0
  %969 = vmatpush1.bf16.xpose.msra.mxu0 0
  %970 = vmatprep.subr.bf16.mxu0 0
  %971 = vmatpush1.bf16.xpose.msra.mxu0 0
  %972 = vmatprep.subr.bf16.mxu0 0
  %973 = vmatpush1.bf16.xpose.msra.mxu0 0
  %974 = vmatprep.mubr.bf16.mxu0 0
  %975 = vmatmul.mubr.bf16.gmra.mrb[0].mxu0 %v937
  %v976 = vpop.f32.mrb[0].mxu0
  %v977 = vadd.f32 0.0, %v976
  %v978 = vpop.f32.mrb[0].mxu0
  %v979 = vpop.f32.mrb[0].mxu0
  %v980 = vadd.f32 0.0, %v979
  %v981 = vpop.f32.mrb[0].mxu0
  %982 = vdwg.mxu0
  %v983 = vsel %vm32, %v977, -inf
  %984 = vmax.xlane.f32.xlu0 %v983
  %v985 = vpop.xlane.xlu0 %984
  %v986 = vsel %vm32, %v980, -inf
  %987 = vmax.xlane.f32.xlu0 %v986
  %v988 = vpop.xlane.xlu0 %987
  %v989 = vsub.f32 %v977, %v985
  %v990 = vsub.f32 %v980, %v988
  %v991 = vmul.f32 %v989, 1.442695
  %v992 = vpow.pop %v991
  %v993 = vmul.f32 %v990, 1.442695
  %v994 = vpow.pop %v993
  %v995 = vsel %vm32, %v992, 0.0
  %996 = vadd.xlane.f32.xlu0 %v995
  %v997 = vpop.xlane.xlu0 %996
  %v998 = vsel %vm32, %v994, 0.0
  %999 = vadd.xlane.f32.xlu0 %v998
  %v1000 = vpop.xlane.xlu0 %999
  %v1001 = vrcp.pop %v997
  %v1002 = vrcp.pop %v1000
  %v1003 = vmul.f32 %v992, %v1001
  %v1004 = vmul.f32 %v994, %v1002
  %v1005 = vpack.c.bf16 %v1004, %v1003
  %v1007 = vsel %vm32, %v930, 0
  %v1010 = vsel %vm32, %v931, 0
  %v1013 = vsel %vm32, %v1005, 0
  %1015 = vmatprep.subr.bf16.mxu0 0
  %1016 = vmatpush1.bf16.xpose.msra.mxu0 %v1013
  %1017 = vmatprep.subr.bf16.mxu0 0
  %1018 = vmatpush1.bf16.xpose.msra.mxu0 0
  %1019 = vmatprep.subr.bf16.mxu0 0
  %1020 = vmatpush1.bf16.xpose.msra.mxu0 0
  %1021 = vmatprep.subr.bf16.mxu0 0
  %1022 = vmatpush1.bf16.xpose.msra.mxu0 0
  %1023 = vmatprep.subr.bf16.mxu0 0
  %1024 = vmatpush1.bf16.xpose.msra.mxu0 0
  %1025 = vmatprep.subr.bf16.mxu0 0
  %1026 = vmatpush1.bf16.xpose.msra.mxu0 0
  %1027 = vmatprep.subr.bf16.mxu0 0
  %1028 = vmatpush1.bf16.xpose.msra.mxu0 0
  %1029 = vmatprep.subr.bf16.mxu0 0
  %1030 = vmatpush1.bf16.xpose.msra.mxu0 0
  %1031 = vmatprep.subr.bf16.mxu0 0
  %1032 = vmatpush1.bf16.xpose.msra.mxu0 0
  %1033 = vmatprep.subr.bf16.mxu0 0
  %1034 = vmatpush1.bf16.xpose.msra.mxu0 0
  %1035 = vmatprep.subr.bf16.mxu0 0
  %1036 = vmatpush1.bf16.xpose.msra.mxu0 0
  %1037 = vmatprep.subr.bf16.mxu0 0
  %1038 = vmatpush1.bf16.xpose.msra.mxu0 0
  %1039 = vmatprep.subr.bf16.mxu0 0
  %1040 = vmatpush1.bf16.xpose.msra.mxu0 0
  %1041 = vmatprep.subr.bf16.mxu0 0
  %1042 = vmatpush1.bf16.xpose.msra.mxu0 0
  %1043 = vmatprep.subr.bf16.mxu0 0
  %1044 = vmatpush1.bf16.xpose.msra.mxu0 0
  %1045 = vmatprep.subr.bf16.mxu0 0
  %1046 = vmatpush1.bf16.xpose.msra.mxu0 0
  %1047 = vmatprep.mubr.bf16.mxu0 0
  %1048 = vmatmul.mubr.bf16.gmra.mrb[0].mxu0 %v1007
  %v1049 = vpop.f32.mrb[0].mxu0
  %v1050 = vadd.f32 0.0, %v1049
  %v1051 = vpop.f32.mrb[0].mxu0
  %v1052 = vpop.f32.mrb[0].mxu0
  %v1053 = vadd.f32 0.0, %v1052
  %v1054 = vpop.f32.mrb[0].mxu0
  %1055 = vmatprep.mubr.bf16.mxu0 0
  %1056 = vmatmul.mubr.bf16.gmra.mrb[0].mxu0 %v1010
  %v1057 = vpop.f32.mrb[0].mxu0
  %v1058 = vadd.f32 0.0, %v1057
  %v1059 = vpop.f32.mrb[0].mxu0
  %v1060 = vpop.f32.mrb[0].mxu0
  %v1061 = vadd.f32 0.0, %v1060
  %v1062 = vpop.f32.mrb[0].mxu0
  %1063 = vdwg.mxu0
  %v1065 = vsel %vm32, %v802, 0
  %v1068 = vsel %vm32, %v803, 0
  %v1071 = vsel %vm32, %v875, 0
  %1073 = vmatprep.subr.bf16.mxu0 0
  %1074 = vmatpush1.bf16.xpose.msra.mxu0 %v1071
  %1075 = vmatprep.subr.bf16.mxu0 0
  %1076 = vmatpush1.bf16.xpose.msra.mxu0 0
  %1077 = vmatprep.subr.bf16.mxu0 0
  %1078 = vmatpush1.bf16.xpose.msra.mxu0 0
  %1079 = vmatprep.subr.bf16.mxu0 0
  %1080 = vmatpush1.bf16.xpose.msra.mxu0 0
  %1081 = vmatprep.subr.bf16.mxu0 0
  %1082 = vmatpush1.bf16.xpose.msra.mxu0 0
  %1083 = vmatprep.subr.bf16.mxu0 0
  %1084 = vmatpush1.bf16.xpose.msra.mxu0 0
  %1085 = vmatprep.subr.bf16.mxu0 0
  %1086 = vmatpush1.bf16.xpose.msra.mxu0 0
  %1087 = vmatprep.subr.bf16.mxu0 0
  %1088 = vmatpush1.bf16.xpose.msra.mxu0 0
  %1089 = vmatprep.subr.bf16.mxu0 0
  %1090 = vmatpush1.bf16.xpose.msra.mxu0 0
  %1091 = vmatprep.subr.bf16.mxu0 0
  %1092 = vmatpush1.bf16.xpose.msra.mxu0 0
  %1093 = vmatprep.subr.bf16.mxu0 0
  %1094 = vmatpush1.bf16.xpose.msra.mxu0 0
  %1095 = vmatprep.subr.bf16.mxu0 0
  %1096 = vmatpush1.bf16.xpose.msra.mxu0 0
  %1097 = vmatprep.subr.bf16.mxu0 0
  %1098 = vmatpush1.bf16.xpose.msra.mxu0 0
  %1099 = vmatprep.subr.bf16.mxu0 0
  %1100 = vmatpush1.bf16.xpose.msra.mxu0 0
  %1101 = vmatprep.subr.bf16.mxu0 0
  %1102 = vmatpush1.bf16.xpose.msra.mxu0 0
  %1103 = vmatprep.subr.bf16.mxu0 0
  %1104 = vmatpush1.bf16.xpose.msra.mxu0 0
  %1105 = vmatprep.mubr.bf16.mxu0 0
  %1106 = vmatmul.mubr.bf16.gmra.mrb[0].mxu0 %v1065
  %v1107 = vpop.f32.mrb[0].mxu0
  %v1108 = vadd.f32 %v1050, %v1107
  %v1109 = vpop.f32.mrb[0].mxu0
  %v1110 = vpop.f32.mrb[0].mxu0
  %v1111 = vadd.f32 %v1053, %v1110
  %v1112 = vpop.f32.mrb[0].mxu0
  %1113 = vmatprep.mubr.bf16.mxu0 0
  %1114 = vmatmul.mubr.bf16.gmra.mrb[0].mxu0 %v1068
  %v1115 = vpop.f32.mrb[0].mxu0
  %v1116 = vadd.f32 %v1058, %v1115
  %v1117 = vpop.f32.mrb[0].mxu0
  %v1118 = vpop.f32.mrb[0].mxu0
  %v1119 = vadd.f32 %v1061, %v1118
  %v1120 = vpop.f32.mrb[0].mxu0
  %1121 = vdwg.mxu0
  %v1122 = vadd.f32 %v606, %v1108
  %v1123 = vadd.f32 %v607, %v1111
  %v1124 = vadd.f32 %v608, %v1116
  %v1125 = vadd.f32 %v609, %v1119
  %v1126 = vadd.f32 %v1122, %v580
  %v1127 = vadd.f32 %v1123, %v585
  %v1128 = vadd.f32 %v1124, %v590
  %v1129 = vadd.f32 %v1125, %v595
  %s1130 = scalar_lea.vmem %s2, 32
  %1131 = vst.msk [vmem:[%s1130] sm:$0xff] %vm32, %v1126
  %1132 = vst.msk [vmem:[%s1130 + $0x8] sm:$0xff] %vm32, %v1127
  %1133 = vst.msk [vmem:[%s1130 + $0x10] sm:$0xff] %vm32, %v1128
  %1134 = vst.msk [vmem:[%s1130 + $0x18] sm:$0xff] %vm32, %v1129
  // Predicated region
  $region10: #{attention_block_forward.1} parent=0 // pred_check
    _
  $region11: #{attention_block_forward.1} parent=0 // pred_check_branch
    %1136 = sbr.rel (0) target = $region13
  $region12: #{attention_block_forward.1} parent=0 // pred_region
    _
  $region13: #{attention_block_forward.1} parent=0 // pred_fallthru
    _
  // Predicated region
  $region14: #{attention_block_forward.1} parent=0 // pred_check
    _
  $region15: #{attention_block_forward.1} parent=0 // pred_check_branch
    %1138 = sbr.rel (0) target = $region17
  $region16: #{attention_block_forward.1} parent=0 // pred_region
    _
  $region17: #{attention_block_forward.1} parent=0 // pred_fallthru
    _

</llo_original>
